<compile_context>
chip_gen: v7x
topology: tpu7x:2x2x1
jax: 0.10.0
libtpu: 0.0.40
codegen_flags: <defaults>
</compile_context>

<pallas_src>
import functools

import jax
import jax.numpy as jnp
from jax import lax
from jax.experimental import pallas as pl
from jax.experimental.pallas import tpu as pltpu

_PI = 3.141592653589793
_LANE = 128
_VMEM_LIMIT = 48 * 1024 * 1024       # <= v7x 64 MiB physical, ample on v5e/v6e
_WORKSET_BUDGET = 24 * 1024 * 1024   # target double-buffered working set


def _round_up(x, m):
    return ((x + m - 1) // m) * m


def _pick_tile(n, bytes_per_row, target):
    """Largest 128-aligned tile <= target whose working set fits the budget."""
    tile = min(target, _round_up(max(n, 1), _LANE))
    budget_rows = (_WORKSET_BUDGET // max(bytes_per_row, 1)) // _LANE * _LANE
    budget_rows = max(_LANE, budget_rows)
    return max(_LANE, min(tile, budget_rows))


# ----------------------------- kernels ---------------------------------------
def _rotate_single_kernel(head_ref, tail_ref, cos_ref, sin_ref, out_ref,
                          *, gamma, hp):
    """Score a tile of independent (head, relation, tail) triples.

    head/tail : (TR, 2*hp) bf16 entity rows laid out [re | im]
    cos/sin   : (TR, hp)   bf16 precomputed relation cos/sin
    out       : (1, 1, TR) f32 lane-dense scores
    """
    re_h = head_ref[:, :hp].astype(jnp.float32)
    im_h = head_ref[:, hp:].astype(jnp.float32)
    re_t = tail_ref[:, :hp].astype(jnp.float32)
    im_t = tail_ref[:, hp:].astype(jnp.float32)
    c = cos_ref[...].astype(jnp.float32)
    s = sin_ref[...].astype(jnp.float32)

    re_sc = re_h * c - im_h * s - re_t
    im_sc = re_h * s + im_h * c - im_t
    mag = jnp.sqrt(re_sc * re_sc + im_sc * im_sc)
    score = gamma - jnp.sum(mag, axis=-1)            # (TR,)
    out_ref[...] = score[None, None, :]              # lane-dense


def _rotate_tail_kernel(tidx_ref, head_ref, cos_ref, sin_ref, ent_hbm,
                        out_ref, tbuf, sem, rot_re, rot_im,
                        *, gamma, hp, tile_n, n_pad):
    """Score tile_n negative tails against one resident (head, relation).

    tidx_ref : (B * n_pad,) int32 tail indices in SMEM (scalar prefetch)
    head_ref : (1, 1, 2*hp) bf16 head row [re | im], resident across negatives
    cos/sin  : (1, 1, hp)   bf16 relation trig rows, resident
    ent_hbm  : (nentity, 2*hp) bf16 entity table left in HBM (pl.ANY)
    out      : (1, 1, 1, tile_n) f32 lane-dense scores
    tbuf     : (2, tile_n, 2*hp) bf16 double-buffered gathered tail rows
    sem      : DMA semaphores (2,)
    rot_*    : (tile_n, hp) f32 rotated head, replicated across sublanes
    """
    b = pl.program_id(0)
    j = pl.program_id(1)
    nt = pl.num_programs(1)

    def start_gather(tile_idx, slot):
        base = b * n_pad + tile_idx * tile_n

        def body(r, carry):
            row = tidx_ref[base + r]
            pltpu.make_async_copy(ent_hbm.at[row], tbuf.at[slot, r],
                                  sem.at[slot]).start()
            return carry

        lax.fori_loop(0, tile_n, body, 0, unroll=8)

    def wait_gather(slot):
        def body(r, carry):
            # Same-shaped descriptor; waits for one row-copy worth per iter.
            pltpu.make_async_copy(ent_hbm.at[0], tbuf.at[slot, 0],
                                  sem.at[slot]).wait()
            return carry

        lax.fori_loop(0, tile_n, body, 0, unroll=8)

    @pl.when(j == 0)
    def _():
        # Prime slot 0 and compute the rotated head once per batch row.
        start_gather(0, 0)
        re_h = head_ref[0, :, :hp].astype(jnp.float32)   # (1, hp)
        im_h = head_ref[0, :, hp:].astype(jnp.float32)
        c = cos_ref[0].astype(jnp.float32)               # (1, hp)
        s = sin_ref[0].astype(jnp.float32)
        rot_re[...] = jnp.broadcast_to(re_h * c - im_h * s, (tile_n, hp))
        rot_im[...] = jnp.broadcast_to(re_h * s + im_h * c, (tile_n, hp))

    slot = j & 1

    # Prefetch the next negative tile while this one finishes / is consumed.
    @pl.when(j + 1 < nt)
    def _():
        start_gather(j + 1, 1 - slot)

    wait_gather(slot)

    tails = tbuf[slot]                                   # (tile_n, 2*hp) bf16
    re_t = tails[:, :hp].astype(jnp.float32)
    im_t = tails[:, hp:].astype(jnp.float32)
    re_sc = rot_re[...] - re_t
    im_sc = rot_im[...] - im_t
    mag = jnp.sqrt(re_sc * re_sc + im_sc * im_sc)
    score = gamma - jnp.sum(mag, axis=-1)                # (tile_n,)
    out_ref[...] = score[None, None, None, :]            # lane-dense


# ----------------------------- pallas_call wrappers ---------------------------
def _rotate_single(head_rows, tail_rows, cos_rows, sin_rows, *, gamma,
                   tile_rows, hp):
    """head/tail_rows: (R, 2*hp); cos/sin_rows: (R, hp); R % tile_rows == 0."""
    R = head_rows.shape[0]
    nb = R // tile_rows
    kernel = functools.partial(_rotate_single_kernel, gamma=float(gamma), hp=hp)
    out = pl.pallas_call(
        kernel,
        out_shape=jax.ShapeDtypeStruct((nb, 1, tile_rows), jnp.float32),
        grid_spec=pltpu.PrefetchScalarGridSpec(
            num_scalar_prefetch=0,
            grid=(nb,),
            in_specs=[
                pl.BlockSpec((tile_rows, 2 * hp), lambda i: (i, 0)),
                pl.BlockSpec((tile_rows, 2 * hp), lambda i: (i, 0)),
                pl.BlockSpec((tile_rows, hp), lambda i: (i, 0)),
                pl.BlockSpec((tile_rows, hp), lambda i: (i, 0)),
            ],
            out_specs=pl.BlockSpec((1, 1, tile_rows), lambda i: (i, 0, 0)),
        ),
        compiler_params=pltpu.CompilerParams(
            dimension_semantics=("parallel",),
            vmem_limit_bytes=_VMEM_LIMIT),
    )(head_rows, tail_rows, cos_rows, sin_rows)
    return out.reshape(-1)                                # (R,)


def _rotate_tail_batch(tail_idx_flat, head_rows, cos_rows, sin_rows, ent_table,
                       *, gamma, hp, tile_n, n_pad):
    """tail_idx_flat: (B*n_pad,) int32; head_rows: (B,1,2hp); cos/sin: (B,1,hp);
    ent_table: (nentity, 2hp) bf16 (stays in HBM).  Returns (B, n_pad) f32."""
    B = head_rows.shape[0]
    nt = n_pad // tile_n
    kernel = functools.partial(_rotate_tail_kernel, gamma=float(gamma),
                               hp=hp, tile_n=tile_n, n_pad=n_pad)
    out = pl.pallas_call(
        kernel,
        out_shape=jax.ShapeDtypeStruct((B, nt, 1, tile_n), jnp.float32),
        grid_spec=pltpu.PrefetchScalarGridSpec(
            num_scalar_prefetch=1,
            grid=(B, nt),
            in_specs=[
                pl.BlockSpec((1, 1, 2 * hp), lambda b, j, idx: (b, 0, 0)),
                pl.BlockSpec((1, 1, hp), lambda b, j, idx: (b, 0, 0)),
                pl.BlockSpec((1, 1, hp), lambda b, j, idx: (b, 0, 0)),
                pl.BlockSpec(memory_space=pl.ANY),        # entity table in HBM
            ],
            out_specs=pl.BlockSpec((1, 1, 1, tile_n),
                                   lambda b, j, idx: (b, j, 0, 0)),
            scratch_shapes=[
                pltpu.VMEM((2, tile_n, 2 * hp), ent_table.dtype),
                pltpu.SemaphoreType.DMA((2,)),
                pltpu.VMEM((tile_n, hp), jnp.float32),
                pltpu.VMEM((tile_n, hp), jnp.float32),
            ],
        ),
        compiler_params=pltpu.CompilerParams(
            dimension_semantics=("parallel", "arbitrary"),
            vmem_limit_bytes=_VMEM_LIMIT),
    )(tail_idx_flat, head_rows, cos_rows, sin_rows, ent_table)
    return out.reshape(B, n_pad)


# ----------------------------- model wrapper ---------------------------------
class KGEModelPallas:
    """RotatE KGE model (forward only); parameters built deterministically.

    Note: parameters are stored in bf16 (and relation cos/sin are precomputed
    from them), so scores differ from an f32 PyTorch KGEModel by roughly the
    bf16 quantisation error accumulated over the hidden-dim sum.  Pass
    param_dtype=jnp.float32 if bit-fidelity matters more than bandwidth.
    """

    def __init__(self, nentity, nrelation, hidden_dim, gamma, key,
                 double_entity_embedding=True, double_relation_embedding=False,
                 param_dtype=jnp.bfloat16):
        assert double_entity_embedding and not double_relation_embedding, (
            "RotatE needs double entity embeddings and single relation embeddings")
        self.nentity = nentity
        self.nrelation = nrelation
        self.hidden_dim = hidden_dim
        self.epsilon = 2.0
        self.gamma = float(gamma)
        self.embedding_range = (self.gamma + self.epsilon) / hidden_dim
        self.hidden_pad = _round_up(hidden_dim, _LANE)     # lane-aligned H
        hp = self.hidden_pad

        k_ent, k_rel = jax.random.split(key)
        ent = jax.random.uniform(
            k_ent, (nentity, 2 * hidden_dim), dtype=jnp.float32,
            minval=-self.embedding_range, maxval=self.embedding_range)
        rel = jax.random.uniform(
            k_rel, (nrelation, hidden_dim), dtype=jnp.float32,
            minval=-self.embedding_range, maxval=self.embedding_range)

        # Entity table stored interleaved [re | im] per row, zero-padded to
        # lane multiples -> one DMA per gathered tail row in the fused kernel.
        ent_pad = jnp.zeros((nentity, 2 * hp), jnp.float32)
        ent_pad = ent_pad.at[:, :hidden_dim].set(ent[:, :hidden_dim])
        ent_pad = ent_pad.at[:, hp:hp + hidden_dim].set(ent[:, hidden_dim:])
        self.entity_embedding = ent_pad.astype(param_dtype)   # (nentity, 2*hp)

        rel_pad = jnp.zeros((nrelation, hp), jnp.float32).at[:, :hidden_dim].set(rel)
        self.relation_embedding = rel_pad.astype(param_dtype)  # kept for fidelity
        # Precomputed trig tables: kernels only need sqrt on the EUP.  Padded
        # columns have phase 0 (cos=1, sin=0) but entity halves are 0 there, so
        # padded lanes contribute exactly 0 to the score.
        phase = rel_pad * (_PI / self.embedding_range)
        self.rel_cos = jnp.cos(phase).astype(param_dtype)
        self.rel_sin = jnp.sin(phase).astype(param_dtype)

    def forward(self, sample, mode="single"):
        hp = self.hidden_pad
        if mode == "single":
            sample = sample.astype(jnp.int32)
            B = sample.shape[0]
            # bf16 streams per row: head 2hp + tail 2hp + cos hp + sin hp,
            # double buffered.
            bytes_per_row = 2 * (2 * (2 * hp) + 2 * hp) * 2
            tile_rows = _pick_tile(B, bytes_per_row, target=512)
            B_pad = _round_up(B, tile_rows)
            sp = jnp.pad(sample, ((0, B_pad - B), (0, 0)))   # pads with idx 0
            h, r, t = sp[:, 0], sp[:, 1], sp[:, 2]
            out = _rotate_single(
                self.entity_embedding[h], self.entity_embedding[t],
                self.rel_cos[r], self.rel_sin[r],
                gamma=self.gamma, tile_rows=tile_rows, hp=hp)
            return out[:B].reshape(B, 1)                     # (B, 1)

        elif mode == "tail-batch":
            head_part, tail_part = sample
            head_part = head_part.astype(jnp.int32)          # (B, 3)
            tail_part = tail_part.astype(jnp.int32)          # (B, N)
            B, N = tail_part.shape
            # per negative row: 2-buffer tail slab (2*2hp bf16) + 2 f32 rot rows.
            bytes_per_row = 2 * (2 * hp) * 2 + 2 * hp * 4
            tile_n = _pick_tile(N, bytes_per_row, target=512)
            N_pad = _round_up(N, tile_n)
            tidx = jnp.pad(tail_part, ((0, 0), (0, N_pad - N))).reshape(-1)
            # Tiny per-batch-row gathers (B rows) done by XLA; the big B*N
            # negative gather is fused into the kernel.
            head_rows = self.entity_embedding[head_part[:, 0]][:, None, :]
            cos_rows = self.rel_cos[head_part[:, 1]][:, None, :]
            sin_rows = self.rel_sin[head_part[:, 1]][:, None, :]
            out = _rotate_tail_batch(
                tidx, head_rows, cos_rows, sin_rows, self.entity_embedding,
                gamma=self.gamma, hp=hp, tile_n=tile_n, n_pad=N_pad)
            return out[:, :N]                                # (B, N)

        else:
            # TODO(synk): 'head-batch' negative-sampling mode is not reachable
            # from the reference forward() (which raises ValueError for it).
            raise ValueError("mode %s not supported" % mode)


# ----------------------------- reference (pure JAX) ---------------------------
def _rotate_ref(re_head, im_head, c, s, re_tail, im_tail, gamma):
    re_head = re_head.astype(jnp.float32)
    im_head = im_head.astype(jnp.float32)
    re_tail = re_tail.astype(jnp.float32)
    im_tail = im_tail.astype(jnp.float32)
    c = c.astype(jnp.float32)
    s = s.astype(jnp.float32)
    re_sc = re_head * c - im_head * s - re_tail
    im_sc = re_head * s + im_head * c - im_tail
    return gamma - jnp.sum(jnp.sqrt(re_sc * re_sc + im_sc * im_sc), axis=-1)


if __name__ == "__main__":
    key = jax.random.PRNGKey(0)
    k_model, k_h, k_r, k_t, k_neg = jax.random.split(key, 5)

    nentity, nrelation, hidden, gamma = 300, 12, 64, 12.0
    batch, nneg = 4, 700   # nneg > 512 exercises the double-buffered gather path

    model = KGEModelPallas(nentity, nrelation, hidden, gamma, k_model)
    hp = model.hidden_pad

    # positive triples (B, 3)
    sample = jnp.stack(
        [jax.random.randint(k_h, (batch,), 0, nentity),
         jax.random.randint(k_r, (batch,), 0, nrelation),
         jax.random.randint(k_t, (batch,), 0, nentity)], axis=1).astype(jnp.int32)
    h, r, t = sample[:, 0], sample[:, 1], sample[:, 2]

    ent = model.entity_embedding.astype(jnp.float32)
    cos = model.rel_cos.astype(jnp.float32)
    sin = model.rel_sin.astype(jnp.float32)

    # --- single mode ---
    score = model.forward(sample, mode="single")
    score = jax.block_until_ready(score)
    ref = _rotate_ref(ent[h, :hp], ent[h, hp:], cos[r], sin[r],
                      ent[t, :hp], ent[t, hp:], model.gamma).reshape(batch, 1)
    assert score.shape == (batch, 1)
    assert jnp.allclose(score, ref, atol=5e-3, rtol=5e-3), (
        "single-mode mismatch: max abs diff %f" % float(jnp.max(jnp.abs(score - ref))))

    # --- tail-batch mode ---
    neg_tails = jax.random.randint(k_neg, (batch, nneg), 0, nentity).astype(jnp.int32)
    neg_score = model.forward((sample, neg_tails), mode="tail-batch")
    neg_score = jax.block_until_ready(neg_score)
    flat = neg_tails.reshape(-1)
    ref_neg = _rotate_ref(
        ent[h][:, None, :hp], ent[h][:, None, hp:],
        cos[r][:, None, :], sin[r][:, None, :],
        ent[flat, :hp].reshape(batch, nneg, hp),
        ent[flat, hp:].reshape(batch, nneg, hp),
        model.gamma)
    assert neg_score.shape == (batch, nneg)
    assert jnp.allclose(neg_score, ref_neg, atol=5e-3, rtol=5e-3), (
        "tail-batch mismatch: max abs diff %f"
        % float(jnp.max(jnp.abs(neg_score - ref_neg))))

    print("KERNEL_OK")
</pallas_src>

<mosaic_0001>
module attributes {stable_mosaic.version = 11 : i64} {
  func.func @_rotate_single_kernel(%arg0: i32, %arg1: memref<128x256xbf16, #tpu.memory_space<vmem>>, %arg2: memref<128x256xbf16, #tpu.memory_space<vmem>>, %arg3: memref<128x128xbf16, #tpu.memory_space<vmem>>, %arg4: memref<128x128xbf16, #tpu.memory_space<vmem>>, %arg5: memref<1x1x128xf32, #tpu.memory_space<vmem>>) attributes {dimension_semantics = [#tpu.dimension_semantics<parallel>], iteration_bounds = array<i64: 1>, scalar_prefetch = 0 : i64, scratch_operands = 0 : i64, tpu.core_type = #tpu.core_type<tc>, window_params = [{transform_indices = @transform_0, window_bounds = array<i64: 128, 256>}, {transform_indices = @transform_1, window_bounds = array<i64: 128, 256>}, {transform_indices = @transform_2, window_bounds = array<i64: 128, 128>}, {transform_indices = @transform_3, window_bounds = array<i64: 128, 128>}, {transform_indices = @transform_4, window_bounds = array<i64: 1, 1, 128>}]} {
    %c0 = arith.constant 0 : index
    %c0_0 = arith.constant 0 : index
    %0 = vector.load %arg1[%c0, %c0_0] : memref<128x256xbf16, #tpu.memory_space<vmem>>, vector<128x128xbf16>
    %1 = arith.extf %0 : vector<128x128xbf16> to vector<128x128xf32>
    %c0_1 = arith.constant 0 : index
    %c128 = arith.constant 128 : index
    %2 = vector.load %arg1[%c0_1, %c128] : memref<128x256xbf16, #tpu.memory_space<vmem>>, vector<128x128xbf16>
    %3 = arith.extf %2 : vector<128x128xbf16> to vector<128x128xf32>
    %c0_2 = arith.constant 0 : index
    %c0_3 = arith.constant 0 : index
    %4 = vector.load %arg2[%c0_2, %c0_3] : memref<128x256xbf16, #tpu.memory_space<vmem>>, vector<128x128xbf16>
    %5 = arith.extf %4 : vector<128x128xbf16> to vector<128x128xf32>
    %c0_4 = arith.constant 0 : index
    %c128_5 = arith.constant 128 : index
    %6 = vector.load %arg2[%c0_4, %c128_5] : memref<128x256xbf16, #tpu.memory_space<vmem>>, vector<128x128xbf16>
    %7 = arith.extf %6 : vector<128x128xbf16> to vector<128x128xf32>
    %c0_6 = arith.constant 0 : index
    %c0_7 = arith.constant 0 : index
    %8 = vector.load %arg3[%c0_6, %c0_7] : memref<128x128xbf16, #tpu.memory_space<vmem>>, vector<128x128xbf16>
    %9 = arith.extf %8 : vector<128x128xbf16> to vector<128x128xf32>
    %c0_8 = arith.constant 0 : index
    %c0_9 = arith.constant 0 : index
    %10 = vector.load %arg4[%c0_8, %c0_9] : memref<128x128xbf16, #tpu.memory_space<vmem>>, vector<128x128xbf16>
    %11 = arith.extf %10 : vector<128x128xbf16> to vector<128x128xf32>
    %12 = arith.mulf %1, %9 : vector<128x128xf32>
    %13 = arith.mulf %3, %11 : vector<128x128xf32>
    %14 = arith.subf %12, %13 : vector<128x128xf32>
    %15 = arith.subf %14, %5 : vector<128x128xf32>
    %16 = arith.mulf %1, %11 : vector<128x128xf32>
    %17 = arith.mulf %3, %9 : vector<128x128xf32>
    %18 = arith.addf %16, %17 : vector<128x128xf32>
    %19 = arith.subf %18, %7 : vector<128x128xf32>
    %20 = arith.mulf %15, %15 : vector<128x128xf32>
    %21 = arith.mulf %19, %19 : vector<128x128xf32>
    %22 = arith.addf %20, %21 : vector<128x128xf32>
    %23 = math.sqrt %22 : vector<128x128xf32>
    %cst = arith.constant dense<0.000000e+00> : vector<128xf32>
    %24 = vector.multi_reduction <add>, %23, %cst [1] : vector<128x128xf32> to vector<128xf32>
    %cst_10 = arith.constant 1.200000e+01 : f32
    %25 = vector.broadcast %cst_10 : f32 to vector<128xf32>
    %26 = arith.subf %25, %24 : vector<128xf32>
    %27 = vector.shape_cast %26 : vector<128xf32> to vector<1x1x128xf32>
    %c0_11 = arith.constant 0 : index
    %c0_12 = arith.constant 0 : index
    %c0_13 = arith.constant 0 : index
    %28 = vector.load %arg5[%c0_11, %c0_12, %c0_13] : memref<1x1x128xf32, #tpu.memory_space<vmem>>, vector<1x1x128xf32>
    tpu.vector_store %arg5[%c0_11, %c0_12, %c0_13], %27 {strides = array<i32>} : memref<1x1x128xf32, #tpu.memory_space<vmem>>, vector<1x1x128xf32>,
    return
  }
  func.func @transform_0(%arg0: i32) -> (i32, i32) {
    %c0_i32 = arith.constant 0 : i32
    %c0_i32_0 = arith.constant 0 : i32
    return %arg0, %c0_i32 : i32, i32
  }
  func.func @transform_1(%arg0: i32) -> (i32, i32) {
    %c0_i32 = arith.constant 0 : i32
    %c0_i32_0 = arith.constant 0 : i32
    return %arg0, %c0_i32 : i32, i32
  }
  func.func @transform_2(%arg0: i32) -> (i32, i32) {
    %c0_i32 = arith.constant 0 : i32
    %c0_i32_0 = arith.constant 0 : i32
    return %arg0, %c0_i32 : i32, i32
  }
  func.func @transform_3(%arg0: i32) -> (i32, i32) {
    %c0_i32 = arith.constant 0 : i32
    %c0_i32_0 = arith.constant 0 : i32
    return %arg0, %c0_i32 : i32, i32
  }
  func.func @transform_4(%arg0: i32) -> (i32, i32, i32) {
    %c0_i32 = arith.constant 0 : i32
    %c0_i32_0 = arith.constant 0 : i32
    %c0_i32_1 = arith.constant 0 : i32
    return %arg0, %c0_i32, %c0_i32_0 : i32, i32, i32
  }
}

</mosaic_0001>

<llo_original>
// kernel: tpu_custom_call.1
$region0: #{tpu_custom_call.1}
  #allocation0 [shape = 'u32[]', space=smem, size = 0x4, offset = 0x4, fixed_abs, tag = 'smem constant byte address 0x4 - core index']
  #allocation1 [shape = 'u32[144,128]{1,0:T(1,128)}', space=vmem, size = 0x12000, scoped, tag = 'internal scratch']
  %s0 = inlined_call_operand.hbm [shape: bf16[128,256], index: 0, kind: input, shape index: {}]
  %s1 = inlined_call_operand.hbm [shape: bf16[128,256], index: 1, kind: input, shape index: {}]
  %s2 = inlined_call_operand.hbm [shape: bf16[128,128], index: 2, kind: input, shape index: {}]
  %s3 = inlined_call_operand.hbm [shape: bf16[128,128], index: 3, kind: input, shape index: {}]
  %s4 = inlined_call_operand.hbm [shape: f32[1,1,128], index: 4, kind: output, shape index: {}]
  %s5 = sld [smem:[#allocation0]]
  $region42: #{tpu_custom_call.1} parent=0
    _
  %s7 = ssub.s32 1, %s5
  %s8 = scalar_select 0, %s7, %s5
  $region1: #{tpu_custom_call.1} parent=0
    #allocation2 [shape = 'u8[65536]{0}', space=vmem, size = 0x10000, scoped, tag = 'input window, operand 0, single buffered']
    #allocation3 [shape = 's32[1]{0}', space=sflag, size = 0x4, scoped, tag = 'scoped memory for tpu_custom_call.1']
    #allocation4 [shape = 's32[1]{0}', space=sflag, size = 0x4, scoped, tag = 'scoped memory for tpu_custom_call.1']
    #allocation5 [shape = 'u8[65536]{0}', space=vmem, size = 0x10000, scoped, tag = 'input window, operand 1, single buffered']
    #allocation6 [shape = 's32[1]{0}', space=sflag, size = 0x4, scoped, tag = 'scoped memory for tpu_custom_call.1']
    #allocation7 [shape = 'u8[32768]{0}', space=vmem, size = 0x8000, scoped, tag = 'input window, operand 2, single buffered']
    #allocation8 [shape = 'u8[32768]{0}', space=vmem, size = 0x8000, scoped, tag = 'input window, operand 3, single buffered']
    #allocation9 [shape = 's32[1]{0}', space=sflag, size = 0x4, scoped, tag = 'scoped memory for tpu_custom_call.1']
    #allocation10 [shape = 'u8[512]{0}', space=vmem, size = 0x400, scoped, tag = 'output window, operand 0, single buffered']
    %9 = vsyncpa [#allocation3], 0
    %10 = vsyncpa [#allocation6], 0
    %11 = vsyncpa [#allocation9], 0
    %12 = vsyncpa [#allocation4], 0
    // Predicated region
    $region2: #{tpu_custom_call.1} parent=1 // pred_check
      _
    $region3: #{tpu_custom_call.1} parent=1 // pred_check_branch
      %14 = sbr.rel (0) target = $region5
    $region4: #{tpu_custom_call.1} parent=1 // pred_region
      %s16 = ssub.s32 2048, 2048
      %17 = vsyncadd [#allocation3], %s16
      %s18 = sshll.u32 [#allocation2], 4
      %s19 = int_to_ptr.vmem [resolvable:$true] %s18
      %24 = dma.hbm_to_vmem [thread:$0]  %s0, 2048, %s19, [#allocation3], 128, 128, 8
    $region5: #{tpu_custom_call.1} parent=1 // pred_fallthru
      _
    // Predicated region
    $region6: #{tpu_custom_call.1} parent=1 // pred_check
      _
    $region7: #{tpu_custom_call.1} parent=1 // pred_check_branch
      %26 = sbr.rel (0) target = $region9
    $region8: #{tpu_custom_call.1} parent=1 // pred_region
      %s28 = ssub.s32 2048, 2048
      %29 = vsyncadd [#allocation6], %s28
      %s30 = sshll.u32 [#allocation5], 4
      %s31 = int_to_ptr.vmem [resolvable:$true] %s30
      %36 = dma.hbm_to_vmem [thread:$0]  %s1, 2048, %s31, [#allocation6], 128, 128, 8
    $region9: #{tpu_custom_call.1} parent=1 // pred_fallthru
      _
    // Predicated region
    $region10: #{tpu_custom_call.1} parent=1 // pred_check
      _
    $region11: #{tpu_custom_call.1} parent=1 // pred_check_branch
      %38 = sbr.rel (0) target = $region13
    $region12: #{tpu_custom_call.1} parent=1 // pred_region
      %s40 = ssub.s32 1024, 1024
      %41 = vsyncadd [#allocation6], %s40
      %s42 = sshll.u32 [#allocation7], 4
      %s43 = int_to_ptr.vmem [resolvable:$true] %s42
      %48 = dma.hbm_to_vmem [thread:$0]  %s2, 1024, %s43, [#allocation6], 64, 64, 4
    $region13: #{tpu_custom_call.1} parent=1 // pred_fallthru
      _
    // Predicated region
    $region14: #{tpu_custom_call.1} parent=1 // pred_check
      _
    $region15: #{tpu_custom_call.1} parent=1 // pred_check_branch
      %50 = sbr.rel (0) target = $region17
    $region16: #{tpu_custom_call.1} parent=1 // pred_region
      %s52 = ssub.s32 1024, 1024
      %53 = vsyncadd [#allocation9], %s52
      %s54 = sshll.u32 [#allocation8], 4
      %s55 = int_to_ptr.vmem [resolvable:$true] %s54
      %60 = dma.hbm_to_vmem [thread:$0]  %s3, 1024, %s55, [#allocation9], 64, 64, 4
    $region17: #{tpu_custom_call.1} parent=1 // pred_fallthru
      _
    // Predicated region
    $region18: #{tpu_custom_call.1} parent=1 // pred_check
      _
    $region19: #{tpu_custom_call.1} parent=1 // pred_check_branch
      %62 = sbr.rel (0) target = $region21
    $region20: #{tpu_custom_call.1} parent=1 // pred_region
      %63 = dma.done [#allocation3], 2048
    $region21: #{tpu_custom_call.1} parent=1 // pred_fallthru
      _
    // Predicated region
    $region22: #{tpu_custom_call.1} parent=1 // pred_check
      _
    $region23: #{tpu_custom_call.1} parent=1 // pred_check_branch
      %65 = sbr.rel (0) target = $region25
    $region24: #{tpu_custom_call.1} parent=1 // pred_region
      %66 = dma.done [#allocation6], 2048
    $region25: #{tpu_custom_call.1} parent=1 // pred_fallthru
      _
    // Predicated region
    $region26: #{tpu_custom_call.1} parent=1 // pred_check
      _
    $region27: #{tpu_custom_call.1} parent=1 // pred_check_branch
      %68 = sbr.rel (0) target = $region29
    $region28: #{tpu_custom_call.1} parent=1 // pred_region
      %69 = dma.done [#allocation6], 1024
    $region29: #{tpu_custom_call.1} parent=1 // pred_fallthru
      _
    // Predicated region
    $region30: #{tpu_custom_call.1} parent=1 // pred_check
      _
    $region31: #{tpu_custom_call.1} parent=1 // pred_check_branch
      %71 = sbr.rel (0) target = $region33
    $region32: #{tpu_custom_call.1} parent=1 // pred_region
      %72 = dma.done [#allocation9], 1024
    $region33: #{tpu_custom_call.1} parent=1 // pred_fallthru
      _
    %v73 = vld [vmem:[#allocation2] sm:$0xf]
    %v74 = vld [vmem:[#allocation2 + $0x8] sm:$0xf]
    %v75 = vld [vmem:[#allocation2 + $0x10] sm:$0xf]
    %v76 = vld [vmem:[#allocation2 + $0x18] sm:$0xf]
    %v77 = vld [vmem:[#allocation2 + $0x20] sm:$0xf]
    %v78 = vld [vmem:[#allocation2 + $0x28] sm:$0xf]
    %v79 = vld [vmem:[#allocation2 + $0x30] sm:$0xf]
    %v80 = vld [vmem:[#allocation2 + $0x38] sm:$0xf]
    %v81 = vld [vmem:[#allocation2 + $0x40] sm:$0xf]
    %v82 = vld [vmem:[#allocation2 + $0x48] sm:$0xf]
    %v83 = vld [vmem:[#allocation2 + $0x50] sm:$0xf]
    %v84 = vld [vmem:[#allocation2 + $0x58] sm:$0xf]
    %v85 = vld [vmem:[#allocation2 + $0x60] sm:$0xf]
    %v86 = vld [vmem:[#allocation2 + $0x68] sm:$0xf]
    %v87 = vld [vmem:[#allocation2 + $0x70] sm:$0xf]
    %v88 = vld [vmem:[#allocation2 + $0x78] sm:$0xf]
    %v89 = vunpack.c.l.bf16 %v73
    %v90 = vunpack.c.l.bf16 %v74
    %v91 = vunpack.c.l.bf16 %v75
    %v92 = vunpack.c.l.bf16 %v76
    %v93 = vunpack.c.l.bf16 %v77
    %v94 = vunpack.c.l.bf16 %v78
    %v95 = vunpack.c.l.bf16 %v79
    %v96 = vunpack.c.l.bf16 %v80
    %v97 = vunpack.c.l.bf16 %v81
    %v98 = vunpack.c.l.bf16 %v82
    %v99 = vunpack.c.l.bf16 %v83
    %v100 = vunpack.c.l.bf16 %v84
    %v101 = vunpack.c.l.bf16 %v85
    %v102 = vunpack.c.l.bf16 %v86
    %v103 = vunpack.c.l.bf16 %v87
    %v104 = vunpack.c.l.bf16 %v88
    %v105 = vld [vmem:[#allocation2 + $0x4] sm:$0xf]
    %v106 = vld [vmem:[#allocation2 + $0xc] sm:$0xf]
    %v107 = vld [vmem:[#allocation2 + $0x14] sm:$0xf]
    %v108 = vld [vmem:[#allocation2 + $0x1c] sm:$0xf]
    %v109 = vld [vmem:[#allocation2 + $0x24] sm:$0xf]
    %v110 = vld [vmem:[#allocation2 + $0x2c] sm:$0xf]
    %v111 = vld [vmem:[#allocation2 + $0x34] sm:$0xf]
    %v112 = vld [vmem:[#allocation2 + $0x3c] sm:$0xf]
    %v113 = vld [vmem:[#allocation2 + $0x44] sm:$0xf]
    %v114 = vld [vmem:[#allocation2 + $0x4c] sm:$0xf]
    %v115 = vld [vmem:[#allocation2 + $0x54] sm:$0xf]
    %v116 = vld [vmem:[#allocation2 + $0x5c] sm:$0xf]
    %v117 = vld [vmem:[#allocation2 + $0x64] sm:$0xf]
    %v118 = vld [vmem:[#allocation2 + $0x6c] sm:$0xf]
    %v119 = vld [vmem:[#allocation2 + $0x74] sm:$0xf]
    %v120 = vld [vmem:[#allocation2 + $0x7c] sm:$0xf]
    %v121 = vunpack.c.l.bf16 %v105
    %v122 = vunpack.c.l.bf16 %v106
    %v123 = vunpack.c.l.bf16 %v107
    %v124 = vunpack.c.l.bf16 %v108
    %v125 = vunpack.c.l.bf16 %v109
    %v126 = vunpack.c.l.bf16 %v110
    %v127 = vunpack.c.l.bf16 %v111
    %v128 = vunpack.c.l.bf16 %v112
    %v129 = vunpack.c.l.bf16 %v113
    %v130 = vunpack.c.l.bf16 %v114
    %v131 = vunpack.c.l.bf16 %v115
    %v132 = vunpack.c.l.bf16 %v116
    %v133 = vunpack.c.l.bf16 %v117
    %v134 = vunpack.c.l.bf16 %v118
    %v135 = vunpack.c.l.bf16 %v119
    %v136 = vunpack.c.l.bf16 %v120
    %v137 = vld [vmem:[#allocation5] sm:$0xf]
    %v138 = vld [vmem:[#allocation5 + $0x8] sm:$0xf]
    %v139 = vld [vmem:[#allocation5 + $0x10] sm:$0xf]
    %v140 = vld [vmem:[#allocation5 + $0x18] sm:$0xf]
    %v141 = vld [vmem:[#allocation5 + $0x20] sm:$0xf]
    %v142 = vld [vmem:[#allocation5 + $0x28] sm:$0xf]
    %v143 = vld [vmem:[#allocation5 + $0x30] sm:$0xf]
    %v144 = vld [vmem:[#allocation5 + $0x38] sm:$0xf]
    %v145 = vld [vmem:[#allocation5 + $0x40] sm:$0xf]
    %v146 = vld [vmem:[#allocation5 + $0x48] sm:$0xf]
    %v147 = vld [vmem:[#allocation5 + $0x50] sm:$0xf]
    %v148 = vld [vmem:[#allocation5 + $0x58] sm:$0xf]
    %v149 = vld [vmem:[#allocation5 + $0x60] sm:$0xf]
    %v150 = vld [vmem:[#allocation5 + $0x68] sm:$0xf]
    %v151 = vld [vmem:[#allocation5 + $0x70] sm:$0xf]
    %v152 = vld [vmem:[#allocation5 + $0x78] sm:$0xf]
    %v153 = vunpack.c.l.bf16 %v137
    %v154 = vunpack.c.l.bf16 %v138
    %v155 = vunpack.c.l.bf16 %v139
    %v156 = vunpack.c.l.bf16 %v140
    %v157 = vunpack.c.l.bf16 %v141
    %v158 = vunpack.c.l.bf16 %v142
    %v159 = vunpack.c.l.bf16 %v143
    %v160 = vunpack.c.l.bf16 %v144
    %v161 = vunpack.c.l.bf16 %v145
    %v162 = vunpack.c.l.bf16 %v146
    %v163 = vunpack.c.l.bf16 %v147
    %v164 = vunpack.c.l.bf16 %v148
    %v165 = vunpack.c.l.bf16 %v149
    %v166 = vunpack.c.l.bf16 %v150
    %v167 = vunpack.c.l.bf16 %v151
    %v168 = vunpack.c.l.bf16 %v152
    %v169 = vld [vmem:[#allocation5 + $0x4] sm:$0xf]
    %v170 = vld [vmem:[#allocation5 + $0xc] sm:$0xf]
    %v171 = vld [vmem:[#allocation5 + $0x14] sm:$0xf]
    %v172 = vld [vmem:[#allocation5 + $0x1c] sm:$0xf]
    %v173 = vld [vmem:[#allocation5 + $0x24] sm:$0xf]
    %v174 = vld [vmem:[#allocation5 + $0x2c] sm:$0xf]
    %v175 = vld [vmem:[#allocation5 + $0x34] sm:$0xf]
    %v176 = vld [vmem:[#allocation5 + $0x3c] sm:$0xf]
    %v177 = vld [vmem:[#allocation5 + $0x44] sm:$0xf]
    %v178 = vld [vmem:[#allocation5 + $0x4c] sm:$0xf]
    %v179 = vld [vmem:[#allocation5 + $0x54] sm:$0xf]
    %v180 = vld [vmem:[#allocation5 + $0x5c] sm:$0xf]
    %v181 = vld [vmem:[#allocation5 + $0x64] sm:$0xf]
    %v182 = vld [vmem:[#allocation5 + $0x6c] sm:$0xf]
    %v183 = vld [vmem:[#allocation5 + $0x74] sm:$0xf]
    %v184 = vld [vmem:[#allocation5 + $0x7c] sm:$0xf]
    %v185 = vunpack.c.l.bf16 %v169
    %v186 = vunpack.c.l.bf16 %v170
    %v187 = vunpack.c.l.bf16 %v171
    %v188 = vunpack.c.l.bf16 %v172
    %v189 = vunpack.c.l.bf16 %v173
    %v190 = vunpack.c.l.bf16 %v174
    %v191 = vunpack.c.l.bf16 %v175
    %v192 = vunpack.c.l.bf16 %v176
    %v193 = vunpack.c.l.bf16 %v177
    %v194 = vunpack.c.l.bf16 %v178
    %v195 = vunpack.c.l.bf16 %v179
    %v196 = vunpack.c.l.bf16 %v180
    %v197 = vunpack.c.l.bf16 %v181
    %v198 = vunpack.c.l.bf16 %v182
    %v199 = vunpack.c.l.bf16 %v183
    %v200 = vunpack.c.l.bf16 %v184
    %v201 = vld [vmem:[#allocation7] sm:$0xf]
    %v202 = vld [vmem:[#allocation7 + $0x4] sm:$0xf]
    %v203 = vld [vmem:[#allocation7 + $0x8] sm:$0xf]
    %v204 = vld [vmem:[#allocation7 + $0xc] sm:$0xf]
    %v205 = vld [vmem:[#allocation7 + $0x10] sm:$0xf]
    %v206 = vld [vmem:[#allocation7 + $0x14] sm:$0xf]
    %v207 = vld [vmem:[#allocation7 + $0x18] sm:$0xf]
    %v208 = vld [vmem:[#allocation7 + $0x1c] sm:$0xf]
    %v209 = vld [vmem:[#allocation7 + $0x20] sm:$0xf]
    %v210 = vld [vmem:[#allocation7 + $0x24] sm:$0xf]
    %v211 = vld [vmem:[#allocation7 + $0x28] sm:$0xf]
    %v212 = vld [vmem:[#allocation7 + $0x2c] sm:$0xf]
    %v213 = vld [vmem:[#allocation7 + $0x30] sm:$0xf]
    %v214 = vld [vmem:[#allocation7 + $0x34] sm:$0xf]
    %v215 = vld [vmem:[#allocation7 + $0x38] sm:$0xf]
    %v216 = vld [vmem:[#allocation7 + $0x3c] sm:$0xf]
    %v217 = vunpack.c.l.bf16 %v201
    %v218 = vunpack.c.l.bf16 %v202
    %v219 = vunpack.c.l.bf16 %v203
    %v220 = vunpack.c.l.bf16 %v204
    %v221 = vunpack.c.l.bf16 %v205
    %v222 = vunpack.c.l.bf16 %v206
    %v223 = vunpack.c.l.bf16 %v207
    %v224 = vunpack.c.l.bf16 %v208
    %v225 = vunpack.c.l.bf16 %v209
    %v226 = vunpack.c.l.bf16 %v210
    %v227 = vunpack.c.l.bf16 %v211
    %v228 = vunpack.c.l.bf16 %v212
    %v229 = vunpack.c.l.bf16 %v213
    %v230 = vunpack.c.l.bf16 %v214
    %v231 = vunpack.c.l.bf16 %v215
    %v232 = vunpack.c.l.bf16 %v216
    %v233 = vld [vmem:[#allocation8] sm:$0xf]
    %v234 = vld [vmem:[#allocation8 + $0x4] sm:$0xf]
    %v235 = vld [vmem:[#allocation8 + $0x8] sm:$0xf]
    %v236 = vld [vmem:[#allocation8 + $0xc] sm:$0xf]
    %v237 = vld [vmem:[#allocation8 + $0x10] sm:$0xf]
    %v238 = vld [vmem:[#allocation8 + $0x14] sm:$0xf]
    %v239 = vld [vmem:[#allocation8 + $0x18] sm:$0xf]
    %v240 = vld [vmem:[#allocation8 + $0x1c] sm:$0xf]
    %v241 = vld [vmem:[#allocation8 + $0x20] sm:$0xf]
    %v242 = vld [vmem:[#allocation8 + $0x24] sm:$0xf]
    %v243 = vld [vmem:[#allocation8 + $0x28] sm:$0xf]
    %v244 = vld [vmem:[#allocation8 + $0x2c] sm:$0xf]
    %v245 = vld [vmem:[#allocation8 + $0x30] sm:$0xf]
    %v246 = vld [vmem:[#allocation8 + $0x34] sm:$0xf]
    %v247 = vld [vmem:[#allocation8 + $0x38] sm:$0xf]
    %v248 = vld [vmem:[#allocation8 + $0x3c] sm:$0xf]
    %v249 = vunpack.c.l.bf16 %v233
    %v250 = vunpack.c.l.bf16 %v234
    %v251 = vunpack.c.l.bf16 %v235
    %v252 = vunpack.c.l.bf16 %v236
    %v253 = vunpack.c.l.bf16 %v237
    %v254 = vunpack.c.l.bf16 %v238
    %v255 = vunpack.c.l.bf16 %v239
    %v256 = vunpack.c.l.bf16 %v240
    %v257 = vunpack.c.l.bf16 %v241
    %v258 = vunpack.c.l.bf16 %v242
    %v259 = vunpack.c.l.bf16 %v243
    %v260 = vunpack.c.l.bf16 %v244
    %v261 = vunpack.c.l.bf16 %v245
    %v262 = vunpack.c.l.bf16 %v246
    %v263 = vunpack.c.l.bf16 %v247
    %v264 = vunpack.c.l.bf16 %v248
    %v265 = vmul.f32 %v89, %v217
    %v266 = vmul.f32 %v90, %v218
    %v267 = vmul.f32 %v91, %v219
    %v268 = vmul.f32 %v92, %v220
    %v269 = vmul.f32 %v93, %v221
    %v270 = vmul.f32 %v94, %v222
    %v271 = vmul.f32 %v95, %v223
    %v272 = vmul.f32 %v96, %v224
    %v273 = vmul.f32 %v97, %v225
    %v274 = vmul.f32 %v98, %v226
    %v275 = vmul.f32 %v99, %v227
    %v276 = vmul.f32 %v100, %v228
    %v277 = vmul.f32 %v101, %v229
    %v278 = vmul.f32 %v102, %v230
    %v279 = vmul.f32 %v103, %v231
    %v280 = vmul.f32 %v104, %v232
    %v281 = vmul.f32 %v121, %v249
    %v282 = vmul.f32 %v122, %v250
    %v283 = vmul.f32 %v123, %v251
    %v284 = vmul.f32 %v124, %v252
    %v285 = vmul.f32 %v125, %v253
    %v286 = vmul.f32 %v126, %v254
    %v287 = vmul.f32 %v127, %v255
    %v288 = vmul.f32 %v128, %v256
    %v289 = vmul.f32 %v129, %v257
    %v290 = vmul.f32 %v130, %v258
    %v291 = vmul.f32 %v131, %v259
    %v292 = vmul.f32 %v132, %v260
    %v293 = vmul.f32 %v133, %v261
    %v294 = vmul.f32 %v134, %v262
    %v295 = vmul.f32 %v135, %v263
    %v296 = vmul.f32 %v136, %v264
    %v297 = vsub.f32 %v265, %v281
    %v298 = vsub.f32 %v266, %v282
    %v299 = vsub.f32 %v267, %v283
    %v300 = vsub.f32 %v268, %v284
    %v301 = vsub.f32 %v269, %v285
    %v302 = vsub.f32 %v270, %v286
    %v303 = vsub.f32 %v271, %v287
    %v304 = vsub.f32 %v272, %v288
    %v305 = vsub.f32 %v273, %v289
    %v306 = vsub.f32 %v274, %v290
    %v307 = vsub.f32 %v275, %v291
    %v308 = vsub.f32 %v276, %v292
    %v309 = vsub.f32 %v277, %v293
    %v310 = vsub.f32 %v278, %v294
    %v311 = vsub.f32 %v279, %v295
    %v312 = vsub.f32 %v280, %v296
    %v313 = vsub.f32 %v297, %v153
    %v314 = vsub.f32 %v298, %v154
    %v315 = vsub.f32 %v299, %v155
    %v316 = vsub.f32 %v300, %v156
    %v317 = vsub.f32 %v301, %v157
    %v318 = vsub.f32 %v302, %v158
    %v319 = vsub.f32 %v303, %v159
    %v320 = vsub.f32 %v304, %v160
    %v321 = vsub.f32 %v305, %v161
    %v322 = vsub.f32 %v306, %v162
    %v323 = vsub.f32 %v307, %v163
    %v324 = vsub.f32 %v308, %v164
    %v325 = vsub.f32 %v309, %v165
    %v326 = vsub.f32 %v310, %v166
    %v327 = vsub.f32 %v311, %v167
    %v328 = vsub.f32 %v312, %v168
    %v329 = vmul.f32 %v89, %v249
    %v330 = vmul.f32 %v90, %v250
    %v331 = vmul.f32 %v91, %v251
    %v332 = vmul.f32 %v92, %v252
    %v333 = vmul.f32 %v93, %v253
    %v334 = vmul.f32 %v94, %v254
    %v335 = vmul.f32 %v95, %v255
    %v336 = vmul.f32 %v96, %v256
    %v337 = vmul.f32 %v97, %v257
    %v338 = vmul.f32 %v98, %v258
    %v339 = vmul.f32 %v99, %v259
    %v340 = vmul.f32 %v100, %v260
    %v341 = vmul.f32 %v101, %v261
    %v342 = vmul.f32 %v102, %v262
    %v343 = vmul.f32 %v103, %v263
    %v344 = vmul.f32 %v104, %v264
    %v345 = vmul.f32 %v121, %v217
    %v346 = vmul.f32 %v122, %v218
    %v347 = vmul.f32 %v123, %v219
    %v348 = vmul.f32 %v124, %v220
    %v349 = vmul.f32 %v125, %v221
    %v350 = vmul.f32 %v126, %v222
    %v351 = vmul.f32 %v127, %v223
    %v352 = vmul.f32 %v128, %v224
    %v353 = vmul.f32 %v129, %v225
    %v354 = vmul.f32 %v130, %v226
    %v355 = vmul.f32 %v131, %v227
    %v356 = vmul.f32 %v132, %v228
    %v357 = vmul.f32 %v133, %v229
    %v358 = vmul.f32 %v134, %v230
    %v359 = vmul.f32 %v135, %v231
    %v360 = vmul.f32 %v136, %v232
    %v361 = vadd.f32 %v329, %v345
    %v362 = vadd.f32 %v330, %v346
    %v363 = vadd.f32 %v331, %v347
    %v364 = vadd.f32 %v332, %v348
    %v365 = vadd.f32 %v333, %v349
    %v366 = vadd.f32 %v334, %v350
    %v367 = vadd.f32 %v335, %v351
    %v368 = vadd.f32 %v336, %v352
    %v369 = vadd.f32 %v337, %v353
    %v370 = vadd.f32 %v338, %v354
    %v371 = vadd.f32 %v339, %v355
    %v372 = vadd.f32 %v340, %v356
    %v373 = vadd.f32 %v341, %v357
    %v374 = vadd.f32 %v342, %v358
    %v375 = vadd.f32 %v343, %v359
    %v376 = vadd.f32 %v344, %v360
    %v377 = vsub.f32 %v361, %v185
    %v378 = vsub.f32 %v362, %v186
    %v379 = vsub.f32 %v363, %v187
    %v380 = vsub.f32 %v364, %v188
    %v381 = vsub.f32 %v365, %v189
    %v382 = vsub.f32 %v366, %v190
    %v383 = vsub.f32 %v367, %v191
    %v384 = vsub.f32 %v368, %v192
    %v385 = vsub.f32 %v369, %v193
    %v386 = vsub.f32 %v370, %v194
    %v387 = vsub.f32 %v371, %v195
    %v388 = vsub.f32 %v372, %v196
    %v389 = vsub.f32 %v373, %v197
    %v390 = vsub.f32 %v374, %v198
    %v391 = vsub.f32 %v375, %v199
    %v392 = vsub.f32 %v376, %v200
    %v393 = vmul.f32 %v313, %v313
    %v394 = vmul.f32 %v314, %v314
    %v395 = vmul.f32 %v315, %v315
    %v396 = vmul.f32 %v316, %v316
    %v397 = vmul.f32 %v317, %v317
    %v398 = vmul.f32 %v318, %v318
    %v399 = vmul.f32 %v319, %v319
    %v400 = vmul.f32 %v320, %v320
    %v401 = vmul.f32 %v321, %v321
    %v402 = vmul.f32 %v322, %v322
    %v403 = vmul.f32 %v323, %v323
    %v404 = vmul.f32 %v324, %v324
    %v405 = vmul.f32 %v325, %v325
    %v406 = vmul.f32 %v326, %v326
    %v407 = vmul.f32 %v327, %v327
    %v408 = vmul.f32 %v328, %v328
    %v409 = vmul.f32 %v377, %v377
    %v410 = vmul.f32 %v378, %v378
    %v411 = vmul.f32 %v379, %v379
    %v412 = vmul.f32 %v380, %v380
    %v413 = vmul.f32 %v381, %v381
    %v414 = vmul.f32 %v382, %v382
    %v415 = vmul.f32 %v383, %v383
    %v416 = vmul.f32 %v384, %v384
    %v417 = vmul.f32 %v385, %v385
    %v418 = vmul.f32 %v386, %v386
    %v419 = vmul.f32 %v387, %v387
    %v420 = vmul.f32 %v388, %v388
    %v421 = vmul.f32 %v389, %v389
    %v422 = vmul.f32 %v390, %v390
    %v423 = vmul.f32 %v391, %v391
    %v424 = vmul.f32 %v392, %v392
    %v425 = vadd.f32 %v393, %v409
    %v426 = vadd.f32 %v394, %v410
    %v427 = vadd.f32 %v395, %v411
    %v428 = vadd.f32 %v396, %v412
    %v429 = vadd.f32 %v397, %v413
    %v430 = vadd.f32 %v398, %v414
    %v431 = vadd.f32 %v399, %v415
    %v432 = vadd.f32 %v400, %v416
    %v433 = vadd.f32 %v401, %v417
    %v434 = vadd.f32 %v402, %v418
    %v435 = vadd.f32 %v403, %v419
    %v436 = vadd.f32 %v404, %v420
    %v437 = vadd.f32 %v405, %v421
    %v438 = vadd.f32 %v406, %v422
    %v439 = vadd.f32 %v407, %v423
    %v440 = vadd.f32 %v408, %v424
    %v441 = vrsqrt.pop %v425
    %v442 = vmul.f32 %v425, %v441
    %vm443 = vcmp.eq.f32.partialorder %v425, inf
    %v444 = vsel %vm443, %v425, %v442
    %vm445 = vcmp.eq.f32.partialorder %v425, 0.0
    %v446 = vand.u32 %v425, 2147483648
    %v447 = vsel %vm445, %v446, %v444
    %v448 = vrsqrt.pop %v426
    %v449 = vmul.f32 %v426, %v448
    %vm450 = vcmp.eq.f32.partialorder %v426, inf
    %v451 = vsel %vm450, %v426, %v449
    %vm452 = vcmp.eq.f32.partialorder %v426, 0.0
    %v453 = vand.u32 %v426, 2147483648
    %v454 = vsel %vm452, %v453, %v451
    %v455 = vrsqrt.pop %v427
    %v456 = vmul.f32 %v427, %v455
    %vm457 = vcmp.eq.f32.partialorder %v427, inf
    %v458 = vsel %vm457, %v427, %v456
    %vm459 = vcmp.eq.f32.partialorder %v427, 0.0
    %v460 = vand.u32 %v427, 2147483648
    %v461 = vsel %vm459, %v460, %v458
    %v462 = vrsqrt.pop %v428
    %v463 = vmul.f32 %v428, %v462
    %vm464 = vcmp.eq.f32.partialorder %v428, inf
    %v465 = vsel %vm464, %v428, %v463
    %vm466 = vcmp.eq.f32.partialorder %v428, 0.0
    %v467 = vand.u32 %v428, 2147483648
    %v468 = vsel %vm466, %v467, %v465
    %v469 = vrsqrt.pop %v429
    %v470 = vmul.f32 %v429, %v469
    %vm471 = vcmp.eq.f32.partialorder %v429, inf
    %v472 = vsel %vm471, %v429, %v470
    %vm473 = vcmp.eq.f32.partialorder %v429, 0.0
    %v474 = vand.u32 %v429, 2147483648
    %v475 = vsel %vm473, %v474, %v472
    %v476 = vrsqrt.pop %v430
    %v477 = vmul.f32 %v430, %v476
    %vm478 = vcmp.eq.f32.partialorder %v430, inf
    %v479 = vsel %vm478, %v430, %v477
    %vm480 = vcmp.eq.f32.partialorder %v430, 0.0
    %v481 = vand.u32 %v430, 2147483648
    %v482 = vsel %vm480, %v481, %v479
    %v483 = vrsqrt.pop %v431
    %v484 = vmul.f32 %v431, %v483
    %vm485 = vcmp.eq.f32.partialorder %v431, inf
    %v486 = vsel %vm485, %v431, %v484
    %vm487 = vcmp.eq.f32.partialorder %v431, 0.0
    %v488 = vand.u32 %v431, 2147483648
    %v489 = vsel %vm487, %v488, %v486
    %v490 = vrsqrt.pop %v432
    %v491 = vmul.f32 %v432, %v490
    %vm492 = vcmp.eq.f32.partialorder %v432, inf
    %v493 = vsel %vm492, %v432, %v491
    %vm494 = vcmp.eq.f32.partialorder %v432, 0.0
    %v495 = vand.u32 %v432, 2147483648
    %v496 = vsel %vm494, %v495, %v493
    %v497 = vrsqrt.pop %v433
    %v498 = vmul.f32 %v433, %v497
    %vm499 = vcmp.eq.f32.partialorder %v433, inf
    %v500 = vsel %vm499, %v433, %v498
    %vm501 = vcmp.eq.f32.partialorder %v433, 0.0
    %v502 = vand.u32 %v433, 2147483648
    %v503 = vsel %vm501, %v502, %v500
    %v504 = vrsqrt.pop %v434
    %v505 = vmul.f32 %v434, %v504
    %vm506 = vcmp.eq.f32.partialorder %v434, inf
    %v507 = vsel %vm506, %v434, %v505
    %vm508 = vcmp.eq.f32.partialorder %v434, 0.0
    %v509 = vand.u32 %v434, 2147483648
    %v510 = vsel %vm508, %v509, %v507
    %v511 = vrsqrt.pop %v435
    %v512 = vmul.f32 %v435, %v511
    %vm513 = vcmp.eq.f32.partialorder %v435, inf
    %v514 = vsel %vm513, %v435, %v512
    %vm515 = vcmp.eq.f32.partialorder %v435, 0.0
    %v516 = vand.u32 %v435, 2147483648
    %v517 = vsel %vm515, %v516, %v514
    %v518 = vrsqrt.pop %v436
    %v519 = vmul.f32 %v436, %v518
    %vm520 = vcmp.eq.f32.partialorder %v436, inf
    %v521 = vsel %vm520, %v436, %v519
    %vm522 = vcmp.eq.f32.partialorder %v436, 0.0
    %v523 = vand.u32 %v436, 2147483648
    %v524 = vsel %vm522, %v523, %v521
    %v525 = vrsqrt.pop %v437
    %v526 = vmul.f32 %v437, %v525
    %vm527 = vcmp.eq.f32.partialorder %v437, inf
    %v528 = vsel %vm527, %v437, %v526
    %vm529 = vcmp.eq.f32.partialorder %v437, 0.0
    %v530 = vand.u32 %v437, 2147483648
    %v531 = vsel %vm529, %v530, %v528
    %v532 = vrsqrt.pop %v438
    %v533 = vmul.f32 %v438, %v532
    %vm534 = vcmp.eq.f32.partialorder %v438, inf
    %v535 = vsel %vm534, %v438, %v533
    %vm536 = vcmp.eq.f32.partialorder %v438, 0.0
    %v537 = vand.u32 %v438, 2147483648
    %v538 = vsel %vm536, %v537, %v535
    %v539 = vrsqrt.pop %v439
    %v540 = vmul.f32 %v439, %v539
    %vm541 = vcmp.eq.f32.partialorder %v439, inf
    %v542 = vsel %vm541, %v439, %v540
    %vm543 = vcmp.eq.f32.partialorder %v439, 0.0
    %v544 = vand.u32 %v439, 2147483648
    %v545 = vsel %vm543, %v544, %v542
    %v546 = vrsqrt.pop %v440
    %v547 = vmul.f32 %v440, %v546
    %vm548 = vcmp.eq.f32.partialorder %v440, inf
    %v549 = vsel %vm548, %v440, %v547
    %vm550 = vcmp.eq.f32.partialorder %v440, 0.0
    %v551 = vand.u32 %v440, 2147483648
    %v552 = vsel %vm550, %v551, %v549
    %553 = vadd.xlane.f32.xlu0 %v447
    %v554 = vpop.xlane.xlu0 %553
    %555 = vadd.xlane.f32.xlu0 %v454
    %v556 = vpop.xlane.xlu0 %555
    %557 = vadd.xlane.f32.xlu0 %v461
    %v558 = vpop.xlane.xlu0 %557
    %559 = vadd.xlane.f32.xlu0 %v468
    %v560 = vpop.xlane.xlu0 %559
    %561 = vadd.xlane.f32.xlu0 %v475
    %v562 = vpop.xlane.xlu0 %561
    %563 = vadd.xlane.f32.xlu0 %v482
    %v564 = vpop.xlane.xlu0 %563
    %565 = vadd.xlane.f32.xlu0 %v489
    %v566 = vpop.xlane.xlu0 %565
    %567 = vadd.xlane.f32.xlu0 %v496
    %v568 = vpop.xlane.xlu0 %567
    %569 = vadd.xlane.f32.xlu0 %v503
    %v570 = vpop.xlane.xlu0 %569
    %571 = vadd.xlane.f32.xlu0 %v510
    %v572 = vpop.xlane.xlu0 %571
    %573 = vadd.xlane.f32.xlu0 %v517
    %v574 = vpop.xlane.xlu0 %573
    %575 = vadd.xlane.f32.xlu0 %v524
    %v576 = vpop.xlane.xlu0 %575
    %577 = vadd.xlane.f32.xlu0 %v531
    %v578 = vpop.xlane.xlu0 %577
    %579 = vadd.xlane.f32.xlu0 %v538
    %v580 = vpop.xlane.xlu0 %579
    %581 = vadd.xlane.f32.xlu0 %v545
    %v582 = vpop.xlane.xlu0 %581
    %583 = vadd.xlane.f32.xlu0 %v552
    %v584 = vpop.xlane.xlu0 %583
    %v585 = vsub.f32 12.0, %v554
    %v586 = vsub.f32 12.0, %v556
    %v587 = vsub.f32 12.0, %v558
    %v588 = vsub.f32 12.0, %v560
    %v589 = vsub.f32 12.0, %v562
    %v590 = vsub.f32 12.0, %v564
    %v591 = vsub.f32 12.0, %v566
    %v592 = vsub.f32 12.0, %v568
    %v593 = vsub.f32 12.0, %v570
    %v594 = vsub.f32 12.0, %v572
    %v595 = vsub.f32 12.0, %v574
    %v596 = vsub.f32 12.0, %v576
    %v597 = vsub.f32 12.0, %v578
    %v598 = vsub.f32 12.0, %v580
    %v599 = vsub.f32 12.0, %v582
    %v600 = vsub.f32 12.0, %v584
    %v617 = vlaneseq
    %v618 = vand.u32 %v617, 127
    %v619 = vlaneseq
    %v620 = vshrl.u32 %v619, 7
    %v621 = vsub.s32 %v618, %v620
    %v622 = vrot.slane %v585, %v621
    %v623 = vadd.s32 %v618, 4294967288
    %v624 = vlaneseq
    %v625 = vshrl.u32 %v624, 7
    %v626 = vsub.s32 %v623, %v625
    %v627 = vrot.slane %v586, %v626
    %vm628 = vcmask 130112
    %v629 = vsel %vm628, %v627, %v622
    %v630 = vadd.s32 %v618, 4294967280
    %v631 = vlaneseq
    %v632 = vshrl.u32 %v631, 7
    %v633 = vsub.s32 %v630, %v632
    %v634 = vrot.slane %v587, %v633
    %vm635 = vcmask 195712
    %v636 = vsel %vm635, %v634, %v629
    %v637 = vadd.s32 %v618, 4294967272
    %v638 = vlaneseq
    %v639 = vshrl.u32 %v638, 7
    %v640 = vsub.s32 %v637, %v639
    %v641 = vrot.slane %v588, %v640
    %vm642 = vcmask 261312
    %v643 = vsel %vm642, %v641, %v636
    %v644 = vadd.s32 %v618, 4294967264
    %v645 = vlaneseq
    %v646 = vshrl.u32 %v645, 7
    %v647 = vsub.s32 %v644, %v646
    %v648 = vrot.slane %v589, %v647
    %vm649 = vcmask 326912
    %v650 = vsel %vm649, %v648, %v643
    %v651 = vadd.s32 %v618, 4294967256
    %v652 = vlaneseq
    %v653 = vshrl.u32 %v652, 7
    %v654 = vsub.s32 %v651, %v653
    %v655 = vrot.slane %v590, %v654
    %vm656 = vcmask 392512
    %v657 = vsel %vm656, %v655, %v650
    %v658 = vadd.s32 %v618, 4294967248
    %v659 = vlaneseq
    %v660 = vshrl.u32 %v659, 7
    %v661 = vsub.s32 %v658, %v660
    %v662 = vrot.slane %v591, %v661
    %vm663 = vcmask 458112
    %v664 = vsel %vm663, %v662, %v657
    %v665 = vadd.s32 %v618, 4294967240
    %v666 = vlaneseq
    %v667 = vshrl.u32 %v666, 7
    %v668 = vsub.s32 %v665, %v667
    %v669 = vrot.slane %v592, %v668
    %vm670 = vcmask 523712
    %v671 = vsel %vm670, %v669, %v664
    %v672 = vadd.s32 %v618, 4294967232
    %v673 = vlaneseq
    %v674 = vshrl.u32 %v673, 7
    %v675 = vsub.s32 %v672, %v674
    %v676 = vrot.slane %v593, %v675
    %vm677 = vcmask 589312
    %v678 = vsel %vm677, %v676, %v671
    %v679 = vadd.s32 %v618, 4294967224
    %v680 = vlaneseq
    %v681 = vshrl.u32 %v680, 7
    %v682 = vsub.s32 %v679, %v681
    %v683 = vrot.slane %v594, %v682
    %vm684 = vcmask 654912
    %v685 = vsel %vm684, %v683, %v678
    %v686 = vadd.s32 %v618, 4294967216
    %v687 = vlaneseq
    %v688 = vshrl.u32 %v687, 7
    %v689 = vsub.s32 %v686, %v688
    %v690 = vrot.slane %v595, %v689
    %vm691 = vcmask 720512
    %v692 = vsel %vm691, %v690, %v685
    %v693 = vadd.s32 %v618, 4294967208
    %v694 = vlaneseq
    %v695 = vshrl.u32 %v694, 7
    %v696 = vsub.s32 %v693, %v695
    %v697 = vrot.slane %v596, %v696
    %vm698 = vcmask 786112
    %v699 = vsel %vm698, %v697, %v692
    %v700 = vadd.s32 %v618, 4294967200
    %v701 = vlaneseq
    %v702 = vshrl.u32 %v701, 7
    %v703 = vsub.s32 %v700, %v702
    %v704 = vrot.slane %v597, %v703
    %vm705 = vcmask 851712
    %v706 = vsel %vm705, %v704, %v699
    %v707 = vadd.s32 %v618, 4294967192
    %v708 = vlaneseq
    %v709 = vshrl.u32 %v708, 7
    %v710 = vsub.s32 %v707, %v709
    %v711 = vrot.slane %v598, %v710
    %vm712 = vcmask 917312
    %v713 = vsel %vm712, %v711, %v706
    %v714 = vadd.s32 %v618, 4294967184
    %v715 = vlaneseq
    %v716 = vshrl.u32 %v715, 7
    %v717 = vsub.s32 %v714, %v716
    %v718 = vrot.slane %v599, %v717
    %vm719 = vcmask 982912
    %v720 = vsel %vm719, %v718, %v713
    %v721 = vadd.s32 %v618, 4294967176
    %v722 = vlaneseq
    %v723 = vshrl.u32 %v722, 7
    %v724 = vsub.s32 %v721, %v723
    %v725 = vrot.slane %v600, %v724
    %vm726 = vcmask 1048512
    %v727 = vsel %vm726, %v725, %v720
    %729 = vst [vmem:[#allocation10] sm:$0x1] %v727
    // Predicated region
    $region34: #{tpu_custom_call.1} parent=1 // pred_check
      _
    $region35: #{tpu_custom_call.1} parent=1 // pred_check_branch
      %731 = sbr.rel (0) target = $region37
    $region36: #{tpu_custom_call.1} parent=1 // pred_region
      %s733 = ssub.s32 16, 16
      %734 = vsyncadd [#allocation4], %s733
      %s736 = sshll.u32 [#allocation10], 4
      %s737 = int_to_ptr.vmem [resolvable:$true] %s736
      %739 = dma.vmem_to_hbm [thread:$0]  %s737, 16, %s4, [#allocation4]
    $region37: #{tpu_custom_call.1} parent=1 // pred_fallthru
      _
    // Predicated region
    $region38: #{tpu_custom_call.1} parent=1 // pred_check
      _
    $region39: #{tpu_custom_call.1} parent=1 // pred_check_branch
      %741 = sbr.rel (0) target = $region41
    $region40: #{tpu_custom_call.1} parent=1 // pred_region
      %742 = dma.done [#allocation4], 16
    $region41: #{tpu_custom_call.1} parent=1 // pred_fallthru
      _
    %743 = vsyncpa [#allocation3], 1
    %744 = vsyncpa [#allocation6], 1
    %745 = vsyncpa [#allocation9], 1
    %746 = vsyncpa [#allocation4], 1

</llo_original>
